<compile_context>
chip_gen: v7x
topology: tpu7x:2x2x1
jax: 0.10.0
libtpu: 0.0.40
codegen_flags: <defaults>
</compile_context>

<pallas_src>
import functools

import jax
import jax.numpy as jnp
from jax.experimental import pallas as pl
from jax.experimental.pallas import tpu as pltpu

_VMEM_BLOCK_BUDGET = 8 * 1024 * 1024  # per-grid-step working-set target (bytes)


def _choose_batch_block(B, C_in, C_out, K, L, pad):
    """Pick B_BLK: biggest divisor of B within the VMEM budget, keeping >=2
    grid blocks when B >= 2 so v7x's two TensorCores both get work."""
    per_elem = (
        2 * C_in * L * 4            # x block (caller dtype <= f32), double-buffered
        + 2 * C_out * L * 4         # out block, double-buffered (f32 upper bound)
        + C_in * (L + 2 * pad) * 2  # persistent halo scratch (bf16)
        + K * C_in * L * 2          # stacked im2col temporary (bf16)
        + C_out * L * 4             # f32 accumulator temporary
    )
    b_max = max(1, _VMEM_BLOCK_BUDGET // per_elem)
    divisors = [d for d in range(1, B + 1) if B % d == 0 and d <= b_max] or [1]
    parallel_ok = [d for d in divisors if B // d >= 2]
    return max(parallel_ok) if parallel_ok else max(divisors)


def _fused_conv1d_kernel(x_ref, w_ref, b_ref, o_ref, halo_ref, *, K, pad, b_blk):
    """All filter groups as ONE matmul per batch element (NCL layout).

    x_ref:    (b_blk, C_in, L)        caller dtype; cast to bf16 in-kernel
    w_ref:    (C_out, K*C_in)   bf16  fused weights, index [co, k*C_in + ci]
    b_ref:    (C_out, 1)        f32   fused bias
    o_ref:    (b_blk, C_out, L)       fused (already concatenated) output
    halo_ref: (b_blk, C_in, L+2*pad)  bf16 persistent VMEM halo scratch
    """
    C_in, L = x_ref.shape[1], x_ref.shape[2]

    # In-kernel bf16 cast: no extra wrapper-side HBM pass over x.
    xb = x_ref[...].astype(jnp.bfloat16)                      # (b_blk, C_in, L)

    # Build the halo in the persistent scratch: zero only the 2*pad halo
    # columns (every step -> megacore/"parallel"-safe), write x in the middle.
    if pad > 0:
        z = jnp.zeros((b_blk, C_in, pad), jnp.bfloat16)
        halo_ref[:, :, :pad] = z
        halo_ref[:, :, pad + L:pad + L + pad] = z
    halo_ref[:, :, pad:pad + L] = xb

    w = w_ref[...]                                            # resident bf16 weights
    bias = b_ref[...]                                         # (C_out, 1) f32

    # Unrolled loop over the (static) batch block: one MXU matmul per element
    # with the K taps folded into the contraction dim (K*C_in).
    for bi in range(b_blk):
        stacked = jnp.concatenate(
            [halo_ref[bi, :, k:k + L] for k in range(K)], axis=0)  # (K*C_in, L)
        acc = jnp.dot(w, stacked, preferred_element_type=jnp.float32)  # (C_out, L)
        o_ref[bi] = (acc + bias).astype(o_ref.dtype)


def conv1d_multiple_filters_pallas(x_ncl, w_flat, bias_col, *, K,
                                   out_dtype=jnp.float32):
    """Fused multi-filter Conv1d. x_ncl: (B, C_in, L). Returns (B, C_out_total, L)."""
    B, C_in, L = x_ncl.shape
    C_out = w_flat.shape[0]
    pad = (K - 1) // 2
    b_blk = _choose_batch_block(B, C_in, C_out, K, L, pad)

    kernel = functools.partial(_fused_conv1d_kernel, K=K, pad=pad, b_blk=b_blk)
    return pl.pallas_call(
        kernel,
        out_shape=jax.ShapeDtypeStruct((B, C_out, L), out_dtype),
        grid=(B // b_blk,),
        in_specs=[
            pl.BlockSpec((b_blk, C_in, L), lambda b: (b, 0, 0)),
            pl.BlockSpec((C_out, K * C_in), lambda b: (0, 0)),   # VMEM-resident
            pl.BlockSpec((C_out, 1), lambda b: (0, 0)),          # VMEM-resident
        ],
        out_specs=pl.BlockSpec((b_blk, C_out, L), lambda b: (b, 0, 0)),
        scratch_shapes=[pltpu.VMEM((b_blk, C_in, L + 2 * pad), jnp.bfloat16)],
        compiler_params=pltpu.CompilerParams(
            dimension_semantics=("parallel",),
            vmem_limit_bytes=32 * 1024 * 1024),
    )(x_ncl, w_flat, bias_col)


class Conv1dMultipleFiltersPallas:
    """JAX/Pallas port of Conv1dMultipleFilters (fused, single kernel launch)."""

    def __init__(self, in_channels, kernel_sizes, seq_len, key,
                 out_dtype=jnp.float32):
        self.in_channels = in_channels
        self.kernel_sizes = kernel_sizes
        self.out_dtype = out_dtype
        # Fused zero-embedded-to-K_max path is exact only for odd kernel sizes
        # (even sizes also break the channel concat of the original module).
        assert all(size % 2 == 1 for _, size in kernel_sizes), "odd kernel sizes only"

        self.params = []
        out_lens = []
        for idx, (num, size) in enumerate(kernel_sizes):
            k_w, k_b = jax.random.split(jax.random.fold_in(key, idx))
            # PyTorch Conv1d default init: U(-sqrt(k), sqrt(k)), k = 1/(C_in*K)
            bound = (1.0 / (in_channels * size)) ** 0.5
            w = jax.random.uniform(k_w, (num, in_channels, size),
                                   jnp.float32, -bound, bound)
            b = jax.random.uniform(k_b, (num,), jnp.float32, -bound, bound)
            self.params.append((w, b))
            pad = (size - 1) // 2
            out_lens.append((seq_len + 2 * pad - (size - 1) - 1) // 1 + 1)
        self.output_size = int(sum(out_lens))

        # Fuse all groups: embed each kernel centered in K_max (zeros elsewhere),
        # stack along C_out, then flatten (C_out, C_in, K_max) -> (C_out, K_max*C_in)
        # with index [co, k*C_in + ci] to match the kernel's stacked-im2col order.
        self.k_max = max(size for _, size in kernel_sizes)
        embedded, biases = [], []
        for (w, b), (_, size) in zip(self.params, kernel_sizes):
            off = (self.k_max - size) // 2
            w_emb = jnp.zeros((w.shape[0], in_channels, self.k_max), jnp.float32)
            w_emb = w_emb.at[:, :, off:off + size].set(w)
            embedded.append(w_emb)
            biases.append(b)
        w_full = jnp.concatenate(embedded, axis=0)            # (C_out_total, C_in, K_max)
        self.w_flat = jnp.transpose(w_full, (0, 2, 1)).reshape(
            w_full.shape[0], self.k_max * in_channels).astype(jnp.bfloat16)
        self.bias_col = jnp.concatenate(biases).reshape(-1, 1).astype(jnp.float32)

    def __call__(self, inputs):
        # inputs: (B, C_in, L) NCL -> (B, sum(num_filters), L), same as torch.cat(..., 1)
        return conv1d_multiple_filters_pallas(inputs, self.w_flat, self.bias_col,
                                              K=self.k_max, out_dtype=self.out_dtype)


def _conv1d_ref(x_ncl, weight, bias):
    """Pure-JAX reference (lax conv) for correctness checking."""
    K = weight.shape[-1]
    pad = (K - 1) // 2
    out = jax.lax.conv_general_dilated(
        x_ncl, weight, window_strides=(1,), padding=[(pad, pad)],
        dimension_numbers=("NCH", "OIH", "NCH"))
    return out + bias[None, :, None]


def _check(B, C_in, L, kernel_sizes, key):
    k_x, k_p = jax.random.split(key)
    x = jax.random.normal(k_x, (B, C_in, L), jnp.float32)
    model = Conv1dMultipleFiltersPallas(C_in, kernel_sizes, L, k_p)
    out = jax.block_until_ready(model(x))

    total_out_ch = sum(num for num, _ in kernel_sizes)
    assert out.shape == (B, total_out_ch, L), out.shape
    assert model.output_size == len(kernel_sizes) * L

    # Reference uses the same bf16-rounded x / weights (MXU multiplies bf16
    # exactly into f32 accumulation, so tolerances stay tight).
    xq = x.astype(jnp.bfloat16).astype(jnp.float32)
    refs = []
    for (w, b) in model.params:
        wq = w.astype(jnp.bfloat16).astype(jnp.float32)
        refs.append(_conv1d_ref(xq, wq, b))
    ref = jnp.concatenate(refs, axis=1)
    assert jnp.allclose(out, ref, atol=1e-3, rtol=1e-3), float(
        jnp.max(jnp.abs(out - ref)))


if __name__ == "__main__":
    key = jax.random.PRNGKey(0)

    # Small shapes consistent with the module: batch=2, channels=4, seq_len=16,
    # odd kernel sizes (num_filters, kernel_size).
    _check(2, 4, 16, [(8, 3), (6, 5), (4, 7)], jax.random.fold_in(key, 0))

    # Larger case exercising batch blocking (B_BLK > 1, grid of 2 parallel
    # blocks) and lane-dense L=128 output stores.
    _check(8, 8, 128, [(16, 3), (8, 5)], jax.random.fold_in(key, 1))

    print("KERNEL_OK")
</pallas_src>

<mosaic_0001>
module attributes {stable_mosaic.version = 11 : i64} {
  func.func @_fused_conv1d_kernel(%arg0: i32, %arg1: memref<1x4x16xf32, #tpu.memory_space<vmem>>, %arg2: memref<18x28xbf16, #tpu.memory_space<vmem>>, %arg3: memref<18x1xf32, #tpu.memory_space<vmem>>, %arg4: memref<1x18x16xf32, #tpu.memory_space<vmem>>, %arg5: memref<1x4x22xbf16, #tpu.memory_space<vmem>>) attributes {dimension_semantics = [#tpu.dimension_semantics<parallel>], iteration_bounds = array<i64: 2>, scalar_prefetch = 0 : i64, scratch_operands = 1 : i64, tpu.core_type = #tpu.core_type<tc>, window_params = [{transform_indices = @transform_0, window_bounds = array<i64: 1, 4, 16>}, {pipeline_mode = #tpu.pipeline_mode<synchronous>, transform_indices = @transform_1, window_bounds = array<i64: 18, 28>}, {pipeline_mode = #tpu.pipeline_mode<synchronous>, transform_indices = @transform_2, window_bounds = array<i64: 18, 1>}, {transform_indices = @transform_3, window_bounds = array<i64: 1, 18, 16>}]} {
    %c0 = arith.constant 0 : index
    %c0_0 = arith.constant 0 : index
    %c0_1 = arith.constant 0 : index
    %0 = vector.load %arg1[%c0, %c0_0, %c0_1] : memref<1x4x16xf32, #tpu.memory_space<vmem>>, vector<1x4x16xf32>
    %1 = arith.truncf %0 : vector<1x4x16xf32> to vector<1x4x16xbf16>
    %cst = arith.constant 0.000000e+00 : bf16
    %2 = vector.broadcast %cst : bf16 to vector<1x4x3xbf16>
    %c0_2 = arith.constant 0 : index
    %c0_3 = arith.constant 0 : index
    %c0_4 = arith.constant 0 : index
    %3 = vector.load %arg5[%c0_2, %c0_3, %c0_4] : memref<1x4x22xbf16, #tpu.memory_space<vmem>>, vector<1x4x3xbf16>
    tpu.vector_store %arg5[%c0_2, %c0_3, %c0_4], %2 {strides = array<i32>} : memref<1x4x22xbf16, #tpu.memory_space<vmem>>, vector<1x4x3xbf16>,
    %c0_5 = arith.constant 0 : index
    %c0_6 = arith.constant 0 : index
    %c19 = arith.constant 19 : index
    %4 = vector.load %arg5[%c0_5, %c0_6, %c19] : memref<1x4x22xbf16, #tpu.memory_space<vmem>>, vector<1x4x3xbf16>
    tpu.vector_store %arg5[%c0_5, %c0_6, %c19], %2 {strides = array<i32>} : memref<1x4x22xbf16, #tpu.memory_space<vmem>>, vector<1x4x3xbf16>,
    %c0_7 = arith.constant 0 : index
    %c0_8 = arith.constant 0 : index
    %c3 = arith.constant 3 : index
    %5 = vector.load %arg5[%c0_7, %c0_8, %c3] : memref<1x4x22xbf16, #tpu.memory_space<vmem>>, vector<1x4x16xbf16>
    tpu.vector_store %arg5[%c0_7, %c0_8, %c3], %1 {strides = array<i32>} : memref<1x4x22xbf16, #tpu.memory_space<vmem>>, vector<1x4x16xbf16>,
    %c0_9 = arith.constant 0 : index
    %c0_10 = arith.constant 0 : index
    %6 = vector.load %arg2[%c0_9, %c0_10] : memref<18x28xbf16, #tpu.memory_space<vmem>>, vector<18x28xbf16>
    %c0_11 = arith.constant 0 : index
    %c0_12 = arith.constant 0 : index
    %7 = vector.load %arg3[%c0_11, %c0_12] : memref<18x1xf32, #tpu.memory_space<vmem>>, vector<18x1xf32>
    %c0_13 = arith.constant 0 : index
    %c0_14 = arith.constant 0 : index
    %c0_15 = arith.constant 0 : index
    %8 = vector.load %arg5[%c0_13, %c0_14, %c0_15] : memref<1x4x22xbf16, #tpu.memory_space<vmem>>, vector<1x4x16xbf16>
    %9 = vector.shape_cast %8 : vector<1x4x16xbf16> to vector<4x16xbf16>
    %c0_16 = arith.constant 0 : index
    %c0_17 = arith.constant 0 : index
    %c1 = arith.constant 1 : index
    %10 = vector.load %arg5[%c0_16, %c0_17, %c1] : memref<1x4x22xbf16, #tpu.memory_space<vmem>>, vector<1x4x16xbf16>
    %11 = vector.shape_cast %10 : vector<1x4x16xbf16> to vector<4x16xbf16>
    %c0_18 = arith.constant 0 : index
    %c0_19 = arith.constant 0 : index
    %c2 = arith.constant 2 : index
    %12 = vector.load %arg5[%c0_18, %c0_19, %c2] : memref<1x4x22xbf16, #tpu.memory_space<vmem>>, vector<1x4x16xbf16>
    %13 = vector.shape_cast %12 : vector<1x4x16xbf16> to vector<4x16xbf16>
    %c0_20 = arith.constant 0 : index
    %c0_21 = arith.constant 0 : index
    %c3_22 = arith.constant 3 : index
    %14 = vector.load %arg5[%c0_20, %c0_21, %c3_22] : memref<1x4x22xbf16, #tpu.memory_space<vmem>>, vector<1x4x16xbf16>
    %15 = vector.shape_cast %14 : vector<1x4x16xbf16> to vector<4x16xbf16>
    %c0_23 = arith.constant 0 : index
    %c0_24 = arith.constant 0 : index
    %c4 = arith.constant 4 : index
    %16 = vector.load %arg5[%c0_23, %c0_24, %c4] : memref<1x4x22xbf16, #tpu.memory_space<vmem>>, vector<1x4x16xbf16>
    %17 = vector.shape_cast %16 : vector<1x4x16xbf16> to vector<4x16xbf16>
    %c0_25 = arith.constant 0 : index
    %c0_26 = arith.constant 0 : index
    %c5 = arith.constant 5 : index
    %18 = vector.load %arg5[%c0_25, %c0_26, %c5] : memref<1x4x22xbf16, #tpu.memory_space<vmem>>, vector<1x4x16xbf16>
    %19 = vector.shape_cast %18 : vector<1x4x16xbf16> to vector<4x16xbf16>
    %c0_27 = arith.constant 0 : index
    %c0_28 = arith.constant 0 : index
    %c6 = arith.constant 6 : index
    %20 = vector.load %arg5[%c0_27, %c0_28, %c6] : memref<1x4x22xbf16, #tpu.memory_space<vmem>>, vector<1x4x16xbf16>
    %21 = vector.shape_cast %20 : vector<1x4x16xbf16> to vector<4x16xbf16>
    %22 = tpu.concatenate %9, %11, %13, %15, %17, %19, %21 in 0 : vector<4x16xbf16>, vector<4x16xbf16>, vector<4x16xbf16>, vector<4x16xbf16>, vector<4x16xbf16>, vector<4x16xbf16>, vector<4x16xbf16> -> vector<28x16xbf16>
    %cst_29 = arith.constant dense<0.000000e+00> : vector<18x16xf32>
    %23 = tpu.matmul %6, %22, %cst_29 {dimension_numbers = #tpu.dot_dimension_numbers<[1], [0], [0], [1], [0, 0, 1, 1], [], []>} : vector<18x28xbf16>, vector<28x16xbf16>, vector<18x16xf32> -> vector<18x16xf32>
    %24 = vector.broadcast %7 : vector<18x1xf32> to vector<18x16xf32>
    %25 = arith.addf %23, %24 : vector<18x16xf32>
    %c0_30 = arith.constant 0 : index
    %c0_31 = arith.constant 0 : index
    %c0_32 = arith.constant 0 : index
    %26 = vector.load %arg4[%c0_30, %c0_31, %c0_32] : memref<1x18x16xf32, #tpu.memory_space<vmem>>, vector<1x18x16xf32>
    %27 = vector.shape_cast %26 : vector<1x18x16xf32> to vector<18x16xf32>
    %28 = vector.shape_cast %25 : vector<18x16xf32> to vector<1x18x16xf32>
    tpu.vector_store %arg4[%c0_30, %c0_31, %c0_32], %28 {strides = array<i32>} : memref<1x18x16xf32, #tpu.memory_space<vmem>>, vector<1x18x16xf32>,
    return
  }
  func.func @transform_0(%arg0: i32) -> (i32, i32, i32) {
    %c0_i32 = arith.constant 0 : i32
    %c0_i32_0 = arith.constant 0 : i32
    %c0_i32_1 = arith.constant 0 : i32
    return %arg0, %c0_i32, %c0_i32_0 : i32, i32, i32
  }
  func.func @transform_1(%arg0: i32) -> (i32, i32) {
    %c0_i32 = arith.constant 0 : i32
    %c0_i32_0 = arith.constant 0 : i32
    %c0_i32_1 = arith.constant 0 : i32
    return %c0_i32, %c0_i32_0 : i32, i32
  }
  func.func @transform_2(%arg0: i32) -> (i32, i32) {
    %c0_i32 = arith.constant 0 : i32
    %c0_i32_0 = arith.constant 0 : i32
    %c0_i32_1 = arith.constant 0 : i32
    return %c0_i32, %c0_i32_0 : i32, i32
  }
  func.func @transform_3(%arg0: i32) -> (i32, i32, i32) {
    %c0_i32 = arith.constant 0 : i32
    %c0_i32_0 = arith.constant 0 : i32
    %c0_i32_1 = arith.constant 0 : i32
    return %arg0, %c0_i32, %c0_i32_0 : i32, i32, i32
  }
}

</mosaic_0001>

<llo_original>
// kernel: tpu_custom_call.1
$region0: #{tpu_custom_call.1}
  #allocation0 [shape = 'u32[]', space=smem, size = 0x4, offset = 0x4, fixed_abs, tag = 'smem constant byte address 0x4 - core index']
  #allocation1 [shape = 'u32[144,128]{1,0:T(1,128)}', space=vmem, size = 0x12000, scoped, tag = 'internal scratch']
  #allocation2 [shape = 'bf16[1,4,22]{2,1,0:T(4,128)(2,1)}', space=vmem, size = 0x400, scoped, tag = 'scratch operand']
  %s0 = inlined_call_operand.vmem [shape: f32[2,4,16], index: 0, kind: input, shape index: {}]
  %s1 = inlined_call_operand.vmem [shape: bf16[18,28], index: 1, kind: input, shape index: {}]
  %s2 = inlined_call_operand.vmem [shape: f32[18,1], index: 2, kind: input, shape index: {}]
  %s3 = inlined_call_operand.vmem [shape: f32[2,18,16], index: 3, kind: output, shape index: {}]
  %s4 = sld [smem:[#allocation0]]
  $region45: #{tpu_custom_call.1} parent=0
    _
  %s6 = ssub.s32 1, %s4
  %s7 = scalar_select 0, %s6, %s4
  loop: start=0, step=1, limit=4
  $region2: #{tpu_custom_call.1} parent=0 // loop_pre_header
    _
  $region3: #{tpu_custom_call.1} parent=0 // loop_header
    %s9 = sphi 0, %s13
    %p10 = scmp.ge.s32.totalorder %s9, 4
    %s19 = sphi 0, %s21
    %s22 = sphi 0, %s19
    %s23 = sphi 0, %s22
    %s39 = sphi 0, %s23
    %s43 = sphi 0, %s43
    %s45 = sphi 0, %s43
    %s46 = sphi 0, %s45
    %s60 = sphi 0, %s46
    %s64 = sphi 0, %s64
    %s66 = sphi 0, %s64
    %s67 = sphi 0, %s66
    %s81 = sphi 0, %s67
    %s87 = sphi 0, %s89
    %s90 = sphi 0, %s87
    %s91 = sphi 0, %s90
    %s107 = sphi 0, %s91
  $region4: #{tpu_custom_call.1} parent=0 // loop_header_branch
    %12 = sbr.rel (%p10) target = $region8
  $region5: #{tpu_custom_call.1} parent=0 // loop_body
    %s14 = ssub.s32 %s9, 1
    %s15 = ssub.s32 %s9, 2
    %s16 = sadd.s32 %s9, 1
    %s17 = ssub.s32 %s9, %s16
    %p18 = scmp.eq.s32.totalorder %s17, 0
    %s20 = sadd.s32 %s19, 1
    %s21 = scalar_select %p18, %s19, %s20
    %p24 = pneg %p18
    %p25 = scmp.eq.s32.totalorder %s9, 1
    %p26 = por %p24, %p25
    %p27 = scmp.ne.s32.totalorder %s19, %s22
    %p28 = scmp.eq.s32.totalorder %s9, 0
    %p29 = por %p27, %p28
    %p30 = scmp.ne.s32.totalorder %s19, %s22
    %p31 = scmp.eq.s32.totalorder %s14, 1
    %p32 = por %p30, %p31
    %p33 = scmp.ne.s32.totalorder %s22, %s23
    %p34 = scmp.eq.s32.totalorder %s14, 0
    %p35 = por %p33, %p34
    %p36 = scmp.ne.s32.totalorder %s22, %s23
    %p37 = scmp.eq.s32.totalorder %s15, 1
    %p38 = por %p36, %p37
    %p40 = scmp.ne.s32.totalorder %s23, %s39
    %p41 = scmp.eq.s32.totalorder %s15, 0
    %p42 = por %p40, %p41
    %s44 = sadd.s32 %s43, 1
    %p47 = scmp.eq.s32.totalorder %s9, 1
    %p48 = scmp.ne.s32.totalorder %s43, %s45
    %p49 = scmp.eq.s32.totalorder %s9, 0
    %p50 = por %p48, %p49
    %p51 = scmp.ne.s32.totalorder %s43, %s45
    %p52 = scmp.eq.s32.totalorder %s14, 1
    %p53 = por %p51, %p52
    %p54 = scmp.ne.s32.totalorder %s45, %s46
    %p55 = scmp.eq.s32.totalorder %s14, 0
    %p56 = por %p54, %p55
    %p57 = scmp.ne.s32.totalorder %s45, %s46
    %p58 = scmp.eq.s32.totalorder %s15, 1
    %p59 = por %p57, %p58
    %p61 = scmp.ne.s32.totalorder %s46, %s60
    %p62 = scmp.eq.s32.totalorder %s15, 0
    %p63 = por %p61, %p62
    %s65 = sadd.s32 %s64, 1
    %p68 = scmp.eq.s32.totalorder %s9, 1
    %p69 = scmp.ne.s32.totalorder %s64, %s66
    %p70 = scmp.eq.s32.totalorder %s9, 0
    %p71 = por %p69, %p70
    %p72 = scmp.ne.s32.totalorder %s64, %s66
    %p73 = scmp.eq.s32.totalorder %s14, 1
    %p74 = por %p72, %p73
    %p75 = scmp.ne.s32.totalorder %s66, %s67
    %p76 = scmp.eq.s32.totalorder %s14, 0
    %p77 = por %p75, %p76
    %p78 = scmp.ne.s32.totalorder %s66, %s67
    %p79 = scmp.eq.s32.totalorder %s15, 1
    %p80 = por %p78, %p79
    %p82 = scmp.ne.s32.totalorder %s67, %s81
    %p83 = scmp.eq.s32.totalorder %s15, 0
    %p84 = por %p82, %p83
    %s85 = ssub.s32 %s9, %s16
    %p86 = scmp.eq.s32.totalorder %s85, 0
    %s88 = sadd.s32 %s87, 1
    %s89 = scalar_select %p86, %s87, %s88
    %p92 = pneg %p86
    %p93 = scmp.eq.s32.totalorder %s9, 1
    %p94 = por %p92, %p93
    %p95 = scmp.ne.s32.totalorder %s87, %s90
    %p96 = scmp.eq.s32.totalorder %s9, 0
    %p97 = por %p95, %p96
    %p98 = scmp.ne.s32.totalorder %s87, %s90
    %p99 = scmp.eq.s32.totalorder %s14, 1
    %p100 = por %p98, %p99
    %p101 = scmp.ne.s32.totalorder %s90, %s91
    %p102 = scmp.eq.s32.totalorder %s14, 0
    %p103 = por %p101, %p102
    %p104 = scmp.ne.s32.totalorder %s90, %s91
    %p105 = scmp.eq.s32.totalorder %s15, 1
    %p106 = por %p104, %p105
    %p108 = scmp.ne.s32.totalorder %s91, %s107
    %p109 = scmp.eq.s32.totalorder %s15, 0
    %p110 = por %p108, %p109
    %p111 = scmp.le.s32.totalorder 1, %s9
    %p112 = scmp.lt.s32.totalorder %s9, 3
    %p113 = pnand %p111, %p112
    %p114 = pneg %p113
    // Predicated region
    $region9: #{tpu_custom_call.1} parent=5 // pred_check
      _
    $region10: #{tpu_custom_call.1} parent=5 // pred_check_branch
      %116 = sbr.rel (%p113) target = $region12
    $region11: #{tpu_custom_call.1} parent=5 // pred_region
      %s117 = ssub.s32 %s9, 1
      // Predicated region
      $region13: #{tpu_custom_call.1} parent=11 // pred_check
        %p118 = pneg %p56
      $region14: #{tpu_custom_call.1} parent=11 // pred_check_branch
        %120 = sbr.rel (%p118) target = $region16
      $region15: #{tpu_custom_call.1} parent=11 // pred_region
        _
      $region16: #{tpu_custom_call.1} parent=11 // pred_fallthru
        _
      // Predicated region
      $region17: #{tpu_custom_call.1} parent=11 // pred_check
        %p121 = pneg %p77
      $region18: #{tpu_custom_call.1} parent=11 // pred_check_branch
        %123 = sbr.rel (%p121) target = $region20
      $region19: #{tpu_custom_call.1} parent=11 // pred_region
        _
      $region20: #{tpu_custom_call.1} parent=11 // pred_fallthru
        _
    $region12: #{tpu_custom_call.1} parent=5 // pred_fallthru
      _
    %p124 = scmp.lt.s32.totalorder %s9, 2
    // Predicated region
    $region21: #{tpu_custom_call.1} parent=5 // pred_check
      %p125 = pneg %p124
    $region22: #{tpu_custom_call.1} parent=5 // pred_check_branch
      %127 = sbr.rel (%p125) target = $region24
    $region23: #{tpu_custom_call.1} parent=5 // pred_region
      // Predicated region
      $region25: #{tpu_custom_call.1} parent=23 // pred_check
        %p128 = pneg %p29
      $region26: #{tpu_custom_call.1} parent=23 // pred_check_branch
        %130 = sbr.rel (%p128) target = $region28
      $region27: #{tpu_custom_call.1} parent=23 // pred_region
        %p131 = scmp.lt.s32.totalorder %s9, 1
        %s132 = scalar_select %p131, %s9, 1
        %s133 = smul.addr %s132, 4
        %s134 = scalar_lea.vmem %s0, %s133
      $region28: #{tpu_custom_call.1} parent=23 // pred_fallthru
        _
    $region24: #{tpu_custom_call.1} parent=5 // pred_fallthru
      _
    %p135 = scmp.le.s32.totalorder 1, %s9
    %p136 = scmp.lt.s32.totalorder %s9, 3
    %p137 = pnand %p135, %p136
    %p138 = pneg %p137
    // Predicated region
    $region29: #{tpu_custom_call.1} parent=5 // pred_check
      _
    $region30: #{tpu_custom_call.1} parent=5 // pred_check_branch
      %140 = sbr.rel (%p137) target = $region32
    $region31: #{tpu_custom_call.1} parent=5 // pred_region
      %s141 = ssub.s32 %s9, 1
      %p142 = scmp.lt.s32.totalorder %s14, 1
      %s143 = scalar_select %p142, %s14, 1
      %s144 = smul.addr %s143, 4
      %s145 = scalar_lea.vmem %s0, %s144
      %p146 = pneg %p35
      %p147 = pneg %p32
      %p148 = pneg %p56
      %p149 = pneg %p53
      %p150 = pneg %p77
      %p151 = pneg %p74
      %p152 = pneg %p103
      %p153 = pneg %p100
      %p154 = scmp.lt.s32.totalorder %s14, 1
      %s155 = scalar_select %p154, %s14, 1
      %s156 = smul.addr %s155, 3
      %s157 = smul.addr %s156, 8
      %s158 = scalar_lea.vmem %s3, %s157
      %p159 = scmp.lt.s32.totalorder %s14, 1
      %s160 = scalar_select %p159, %s14, 1
      %s161 = smul.addr %s160, 4
      %s162 = scalar_lea.vmem %s0, %s161
      %p163 = scmp.lt.s32.totalorder %s14, 1
      %s164 = scalar_select %p163, %s14, 1
      %s165 = smul.addr %s164, 3
      %s166 = smul.addr %s165, 8
      %s167 = scalar_lea.vmem %s3, %s166
      %v169 = vld [vmem:[%s162] sm:$0xf]
      %v170 = vpack.c.bf16 %v169, %v169
      %vm171 = vcmask 17408
      %172 = vst.msk [vmem:[#allocation2] sm:$0x3] %vm171, 0
      %vm173 = vcmask 173208
      %174 = vst.msk [vmem:[#allocation2] sm:$0x3] %vm173, 0
      %v177 = vunpack.c.l.s4 1983009808
      %v178 = vunpack.c.0.s8 %v177
      %v179 = vlaneseq
      %v180 = vshrl.u32 %v179, 7
      %v181 = vsub.s32 %v178, %v180
      %v182 = vrot.slane %v170, %v181
      %183 = vrot.lane.b32.xlu0 %v182, 3
      %v184 = vpop.permute.xlu0 %183
      %vm186 = vcmask 148504
      %187 = vst.msk [vmem:[#allocation2] sm:$0x3] %vm186, %v184
      %v188 = vld [vmem:[%s1] sm:$0xf]
      %v189 = vld [vmem:[%s1 + $0x4] sm:$0xf]
      %v190 = vld [vmem:[%s1 + $0x8] sm:$0x1]
      %v191 = vld [vmem:[%s2] sm:$0xff]
      %v192 = vld [vmem:[%s2 + $0x8] sm:$0xff]
      %v193 = vld [vmem:[%s2 + $0x10] sm:$0x3]
      %v194 = vld [vmem:[#allocation2] sm:$0x3]
      %v196 = vcombine.low %v194, %v194
      %v198 = vunpack.c.l.s4 1983009808
      %v199 = vunpack.c.0.s8 %v198
      %v200 = vlaneseq
      %v201 = vshrl.u32 %v200, 7
      %v202 = vsub.s32 %v199, %v201
      %v203 = vrot.slane %v196, %v202
      %v205 = vunpack.c.l.s4 1983009808
      %v206 = vunpack.c.0.s8 %v205
      %v207 = vlaneseq
      %v208 = vshrl.u32 %v207, 7
      %v209 = vsub.s32 %v206, %v208
      %v210 = vrot.slane %v194, %v209
      %211 = vrot.lane.b32.xlu0 %v203, 127
      %v212 = vpop.permute.xlu0 %211
      %v213 = vcombine.low %v210, %v210
      %214 = vrot.lane.b32.xlu0 %v213, 126
      %v215 = vpop.permute.xlu0 %214
      %v216 = vcombine.low %v203, %v203
      %217 = vrot.lane.b32.xlu0 %v216, 125
      %v218 = vpop.permute.xlu0 %217
      %219 = vrot.lane.b32.xlu0 %v210, 124
      %v220 = vpop.permute.xlu0 %219
      %221 = vrot.lane.b32.xlu0 %v203, 123
      %v222 = vpop.permute.xlu0 %221
      %223 = vrot.lane.b32.xlu0 %v213, 122
      %v224 = vpop.permute.xlu0 %223
      %vm225 = vcmask 1041408
      %v228 = vsel %vm225, %v194, %v212
      %vm229 = vcmask 1043456
      %v231 = vsel %vm229, %v228, %v215
      %vm232 = vcmask 1045504
      %v234 = vsel %vm232, %v231, %v218
      %v238 = vsel %vm225, %v220, %v222
      %v240 = vsel %vm229, %v238, %v224
      %242 = vset.pattern.permute.xlu0 0
      %243 = vperm.xlu0 %242, %v191
      %v244 = vpop.permute.xlu0 %243
      %247 = vset.pattern.permute.xlu0 0
      %248 = vperm.xlu0 %247, %v192
      %v249 = vpop.permute.xlu0 %248
      %252 = vset.pattern.permute.xlu0 0
      %253 = vperm.xlu0 %252, %v193
      %v254 = vpop.permute.xlu0 %253
      %v259 = vunpack.c.l.b16 %v188
      %v260 = vunpack.c.l.b16 %v189
      %v261 = vunpack.c.l.b16 %v190
      %v262 = vpack.c.b16 %v260, %v259
      %v263 = vpack.c.b16 %v261, %v261
      %vm264 = vcmask 228352
      %v266 = vsel %vm264, %v262, 0
      %v269 = vsel %vm264, %v263, 0
      %v271 = vsel %vm232, %v240, 0
      %273 = vmatprep.subr.bf16.mxu0 0
      %274 = vmatpush1.bf16.msra.mxu0 %v234
      %275 = vmatprep.subr.bf16.mxu0 0
      %276 = vmatpush1.bf16.msra.mxu0 %v271
      %277 = vmatprep.subr.bf16.mxu0 0
      %278 = vmatpush1.bf16.msra.mxu0 0
      %279 = vmatprep.subr.bf16.mxu0 0
      %280 = vmatpush1.bf16.msra.mxu0 0
      %281 = vmatprep.subr.bf16.mxu0 0
      %282 = vmatpush1.bf16.msra.mxu0 0
      %283 = vmatprep.subr.bf16.mxu0 0
      %284 = vmatpush1.bf16.msra.mxu0 0
      %285 = vmatprep.subr.bf16.mxu0 0
      %286 = vmatpush1.bf16.msra.mxu0 0
      %287 = vmatprep.subr.bf16.mxu0 0
      %288 = vmatpush1.bf16.msra.mxu0 0
      %289 = vmatprep.subr.bf16.mxu0 0
      %290 = vmatpush1.bf16.msra.mxu0 0
      %291 = vmatprep.subr.bf16.mxu0 0
      %292 = vmatpush1.bf16.msra.mxu0 0
      %293 = vmatprep.subr.bf16.mxu0 0
      %294 = vmatpush1.bf16.msra.mxu0 0
      %295 = vmatprep.subr.bf16.mxu0 0
      %296 = vmatpush1.bf16.msra.mxu0 0
      %297 = vmatprep.subr.bf16.mxu0 0
      %298 = vmatpush1.bf16.msra.mxu0 0
      %299 = vmatprep.subr.bf16.mxu0 0
      %300 = vmatpush1.bf16.msra.mxu0 0
      %301 = vmatprep.subr.bf16.mxu0 0
      %302 = vmatpush1.bf16.msra.mxu0 0
      %303 = vmatprep.subr.bf16.mxu0 0
      %304 = vmatpush1.bf16.msra.mxu0 0
      %305 = vmatprep.mubr.bf16.mxu0 0
      %306 = vmatmul.mubr.bf16.gmra.mrb[0].mxu0 %v266
      %v307 = vpop.f32.mrb[0].mxu0
      %v308 = vadd.f32 %v244, %v307
      %v309 = vpop.f32.mrb[0].mxu0
      %v310 = vpop.f32.mrb[0].mxu0
      %v311 = vadd.f32 %v249, %v310
      %v312 = vpop.f32.mrb[0].mxu0
      %313 = vmatprep.mubr.bf16.mxu0 0
      %314 = vmatmul.mubr.bf16.gmra.mrb[0].mxu0 %v269
      %v315 = vpop.f32.mrb[0].mxu0
      %v316 = vadd.f32 %v254, %v315
      %v317 = vpop.f32.mrb[0].mxu0
      %v318 = vpop.f32.mrb[0].mxu0
      %v319 = vpop.f32.mrb[0].mxu0
      %320 = vdwg.mxu0
      %vm321 = vcmask 130048
      %322 = vst.msk [vmem:[%s167] sm:$0xff] %vm321, %v308
      %323 = vst.msk [vmem:[%s167 + $0x8] sm:$0xff] %vm321, %v311
      %vm324 = vcmask 123904
      %325 = vst.msk [vmem:[%s167 + $0x10] sm:$0x3] %vm324, %v316
      %p326 = scmp.lt.s32.totalorder %s14, 1
      %s327 = scalar_select %p326, %s14, 1
      %s328 = smul.addr %s327, 3
      %s329 = smul.addr %s328, 8
      %s330 = scalar_lea.vmem %s3, %s329
      // Predicated region
      $region33: #{tpu_custom_call.1} parent=31 // pred_check
        %p331 = pneg %p100
      $region34: #{tpu_custom_call.1} parent=31 // pred_check_branch
        %333 = sbr.rel (%p331) target = $region36
      $region35: #{tpu_custom_call.1} parent=31 // pred_region
        _
      $region36: #{tpu_custom_call.1} parent=31 // pred_fallthru
        _
    $region32: #{tpu_custom_call.1} parent=5 // pred_fallthru
      _
    %p334 = scmp.le.s32.totalorder 2, %s9
    // Predicated region
    $region37: #{tpu_custom_call.1} parent=5 // pred_check
      %p335 = pneg %p334
    $region38: #{tpu_custom_call.1} parent=5 // pred_check_branch
      %337 = sbr.rel (%p335) target = $region40
    $region39: #{tpu_custom_call.1} parent=5 // pred_region
      %s338 = ssub.s32 %s9, 2
      // Predicated region
      $region41: #{tpu_custom_call.1} parent=39 // pred_check
        %p339 = pneg %p106
      $region42: #{tpu_custom_call.1} parent=39 // pred_check_branch
        %341 = sbr.rel (%p339) target = $region44
      $region43: #{tpu_custom_call.1} parent=39 // pred_region
        %p342 = scmp.lt.s32.totalorder %s15, 1
        %s343 = scalar_select %p342, %s15, 1
        %s344 = smul.addr %s343, 3
        %s345 = smul.addr %s344, 8
        %s346 = scalar_lea.vmem %s3, %s345
      $region44: #{tpu_custom_call.1} parent=39 // pred_fallthru
        _
    $region40: #{tpu_custom_call.1} parent=5 // pred_fallthru
      _
  $region6: #{tpu_custom_call.1} parent=0 // loop_footer
    %s13 = sadd.s32 1, %s9
  $region7: #{tpu_custom_call.1} parent=0 // loop_footer_branch
    %8 = sbr.rel target = $region3
  $region8: #{tpu_custom_call.1} parent=0 // loop_exit
    _

</llo_original>
